<compile_context>
chip_gen: v5e
topology: v5e:2x2
jax: 0.10.0
libtpu: 0.0.40
codegen_flags: <defaults>
</compile_context>

<pallas_src>
import functools

import jax
import jax.numpy as jnp
from jax.experimental import pallas as pl
from jax.experimental.pallas import tpu as pltpu


def _rln_kernel_packed(x_ref, gamma_ref, beta_ref, bdiag_ref, o_ref, *, eps):
    # x_ref: (TM, packed_D) tile; each 128-lane row holds `pack` logical rows.
    x = jnp.maximum(x_ref[...].astype(jnp.float32), 0.0)          # ReLU
    bdiag = bdiag_ref[...]                                        # (PD, PD) block-diag ones / D
    # Segmented mean/var at full lane width via MXU; result is already
    # broadcast to every lane of its group (no keepdims broadcast needed).
    mean = jnp.dot(x, bdiag, preferred_element_type=jnp.float32)
    centered = x - mean
    var = jnp.dot(centered * centered, bdiag, preferred_element_type=jnp.float32)
    normed = centered * jax.lax.rsqrt(var + eps)
    o_ref[...] = (normed * gamma_ref[...] + beta_ref[...]).astype(o_ref.dtype)


def _rln_kernel_reduce(x_ref, gamma_ref, beta_ref, o_ref, *, eps):
    # pack == 1 path: per-row reduction over the (full) last dim.
    x = jnp.maximum(x_ref[...].astype(jnp.float32), 0.0)          # ReLU
    mean = jnp.mean(x, axis=-1, keepdims=True)
    centered = x - mean
    var = jnp.mean(centered * centered, axis=-1, keepdims=True)
    normed = centered * jax.lax.rsqrt(var + eps)
    o_ref[...] = (normed * gamma_ref[...] + beta_ref[...]).astype(o_ref.dtype)


def _choose_block_rows(rows, packed_D, dtype_bytes, *,
                       vmem_budget_bytes=16 << 20, target_steps=8,
                       max_block_rows=1024):
    """Row-tile size: sublane-aligned, VMEM-footprint-aware (double-buffered
    in+out in native dtype + ~4x f32 temporaries), capped at the measured BW
    plateau, and small enough to leave >= target_steps grid steps."""
    sublane = max(8, 32 // dtype_bytes)            # 8 f32, 16 bf16, 32 int8
    per_row_bytes = packed_D * (4 * dtype_bytes + 4 * 4)
    br = vmem_budget_bytes // max(per_row_bytes, 1)
    br = min(br, max_block_rows)
    if rows > target_steps * sublane:
        br = min(br, pl.cdiv(rows, target_steps))
    br = max(sublane, (br // sublane) * sublane)
    if br >= rows:
        return rows                                # single full-array block
    return br


def relu_layernorm(x, gamma, beta, *, eps=1e-5):
    """Apply ReLU then LayerNorm(D) to x of shape (N, D)."""
    N, D = x.shape
    dtype_bytes = jnp.dtype(x.dtype).itemsize

    # Lane-dense packing for narrow feature dims, only when it is a free
    # row-major reshape (no extra HBM pass).
    pack = 1
    if D < 128 and 128 % D == 0 and N % (128 // D) == 0:
        pack = 128 // D
    # TODO(synk): D values that do not divide 128 (or D > 128 not a multiple
    # of 128) fall back to masked partial-lane stores; lane-padding the packed
    # layout would need an extra HBM pass so it is not done here.
    packed_D = pack * D
    rows = N // pack

    block_rows = _choose_block_rows(rows, packed_D, dtype_bytes)
    grid = (pl.cdiv(rows, block_rows),)

    x_packed = x.reshape(rows, packed_D)
    gamma_row = jnp.tile(gamma.astype(jnp.float32).reshape(-1), pack).reshape(1, packed_D)
    beta_row = jnp.tile(beta.astype(jnp.float32).reshape(-1), pack).reshape(1, packed_D)

    row_spec = pl.BlockSpec((block_rows, packed_D), lambda i: (i, 0))
    vec_spec = pl.BlockSpec((1, packed_D), lambda i: (0, 0))

    if pack > 1:
        group = jnp.arange(packed_D, dtype=jnp.int32) // D
        bdiag = jnp.where(group[:, None] == group[None, :],
                          jnp.float32(1.0 / D), jnp.float32(0.0))
        kernel = functools.partial(_rln_kernel_packed, eps=eps)
        in_specs = [row_spec, vec_spec, vec_spec,
                    pl.BlockSpec((packed_D, packed_D), lambda i: (0, 0))]
        args = (x_packed, gamma_row, beta_row, bdiag)
    else:
        kernel = functools.partial(_rln_kernel_reduce, eps=eps)
        in_specs = [row_spec, vec_spec, vec_spec]
        args = (x_packed, gamma_row, beta_row)

    out_packed = pl.pallas_call(
        kernel,
        out_shape=jax.ShapeDtypeStruct((rows, packed_D), x.dtype),
        grid_spec=pltpu.PrefetchScalarGridSpec(
            num_scalar_prefetch=0,
            grid=grid,
            in_specs=in_specs,
            out_specs=row_spec,
        ),
        compiler_params=pltpu.CompilerParams(
            dimension_semantics=("parallel",),
            vmem_limit_bytes=32 * 1024 * 1024,
        ),
    )(*args)

    return out_packed.reshape(N, D)


def relu_layernorm_ref(x, gamma, beta, eps=1e-5):
    x = jnp.maximum(x.astype(jnp.float32), 0.0)
    mean = jnp.mean(x, axis=-1, keepdims=True)
    var = jnp.mean((x - mean) ** 2, axis=-1, keepdims=True)
    return (x - mean) / jnp.sqrt(var + eps) * gamma + beta


if __name__ == "__main__":
    key = jax.random.PRNGKey(0)
    kx, kg, kb = jax.random.split(key, 3)

    # Small shapes consistent with the module: N nodes, feature dim D.
    N, D = 16, 32
    x = jax.random.normal(kx, (N, D), dtype=jnp.float32)
    gamma = 1.0 + 0.1 * jax.random.normal(kg, (D,), dtype=jnp.float32)
    beta = 0.1 * jax.random.normal(kb, (D,), dtype=jnp.float32)

    out = jax.block_until_ready(relu_layernorm(x, gamma, beta))
    assert out.shape == (N, D)
    assert jnp.allclose(out, relu_layernorm_ref(x, gamma, beta),
                        atol=1e-5, rtol=1e-5), "mismatch vs reference (packed)"

    # Exercise the ragged-tail (partial trailing block) path.
    x2 = jax.random.normal(kx, (300, D), dtype=jnp.float32)
    out2 = jax.block_until_ready(relu_layernorm(x2, gamma, beta))
    assert jnp.allclose(out2, relu_layernorm_ref(x2, gamma, beta),
                        atol=1e-5, rtol=1e-5), "mismatch vs reference (ragged)"

    # Exercise the pack=1 fallback (N not a multiple of 128 // D).
    x3 = jax.random.normal(kb, (13, D), dtype=jnp.float32)
    out3 = jax.block_until_ready(relu_layernorm(x3, gamma, beta))
    assert jnp.allclose(out3, relu_layernorm_ref(x3, gamma, beta),
                        atol=1e-5, rtol=1e-5), "mismatch vs reference (pack=1)"

    # TODO(synk): the DGL graph container (g.nodes[name].data[...]) has no
    # Pallas equivalent; only the (N, D) feature transform is implemented.
    print("KERNEL_OK")
</pallas_src>

<mosaic_0001>
module attributes {stable_mosaic.version = 11 : i64} {
  func.func @_rln_kernel_packed(%arg0: i32, %arg1: memref<4x128xf32, #tpu.memory_space<vmem>>, %arg2: memref<1x128xf32, #tpu.memory_space<vmem>>, %arg3: memref<1x128xf32, #tpu.memory_space<vmem>>, %arg4: memref<128x128xf32, #tpu.memory_space<vmem>>, %arg5: memref<4x128xf32, #tpu.memory_space<vmem>>) attributes {dimension_semantics = [#tpu.dimension_semantics<parallel>], iteration_bounds = array<i64: 1>, scalar_prefetch = 0 : i64, scratch_operands = 0 : i64, tpu.core_type = #tpu.core_type<tc>, window_params = [{transform_indices = @transform_0, window_bounds = array<i64: 4, 128>}, {pipeline_mode = #tpu.pipeline_mode<synchronous>, transform_indices = @transform_1, window_bounds = array<i64: 1, 128>}, {pipeline_mode = #tpu.pipeline_mode<synchronous>, transform_indices = @transform_2, window_bounds = array<i64: 1, 128>}, {pipeline_mode = #tpu.pipeline_mode<synchronous>, transform_indices = @transform_3, window_bounds = array<i64: 128, 128>}, {transform_indices = @transform_4, window_bounds = array<i64: 4, 128>}]} {
    %c0 = arith.constant 0 : index
    %c0_0 = arith.constant 0 : index
    %0 = vector.load %arg1[%c0, %c0_0] : memref<4x128xf32, #tpu.memory_space<vmem>>, vector<4x128xf32>
    %cst = arith.constant 0.000000e+00 : f32
    %1 = vector.broadcast %cst : f32 to vector<4x128xf32>
    %2 = arith.maximumf %0, %1 : vector<4x128xf32>
    %c0_1 = arith.constant 0 : index
    %c0_2 = arith.constant 0 : index
    %3 = vector.load %arg4[%c0_1, %c0_2] : memref<128x128xf32, #tpu.memory_space<vmem>>, vector<128x128xf32>
    %cst_3 = arith.constant dense<0.000000e+00> : vector<4x128xf32>
    %4 = tpu.matmul %2, %3, %cst_3 {dimension_numbers = #tpu.dot_dimension_numbers<[1], [0], [0], [1], [0, 0, 1, 1], [], []>} : vector<4x128xf32>, vector<128x128xf32>, vector<4x128xf32> -> vector<4x128xf32>
    %5 = arith.subf %2, %4 : vector<4x128xf32>
    %6 = arith.mulf %5, %5 : vector<4x128xf32>
    %cst_4 = arith.constant dense<0.000000e+00> : vector<4x128xf32>
    %7 = tpu.matmul %6, %3, %cst_4 {dimension_numbers = #tpu.dot_dimension_numbers<[1], [0], [0], [1], [0, 0, 1, 1], [], []>} : vector<4x128xf32>, vector<128x128xf32>, vector<4x128xf32> -> vector<4x128xf32>
    %cst_5 = arith.constant 9.99999974E-6 : f32
    %8 = vector.broadcast %cst_5 : f32 to vector<4x128xf32>
    %9 = arith.addf %7, %8 : vector<4x128xf32>
    %10 = math.rsqrt %9 : vector<4x128xf32>
    %11 = arith.mulf %5, %10 : vector<4x128xf32>
    %c0_6 = arith.constant 0 : index
    %c0_7 = arith.constant 0 : index
    %12 = vector.load %arg2[%c0_6, %c0_7] : memref<1x128xf32, #tpu.memory_space<vmem>>, vector<1x128xf32>
    %13 = vector.broadcast %12 : vector<1x128xf32> to vector<4x128xf32>
    %14 = arith.mulf %11, %13 : vector<4x128xf32>
    %c0_8 = arith.constant 0 : index
    %c0_9 = arith.constant 0 : index
    %15 = vector.load %arg3[%c0_8, %c0_9] : memref<1x128xf32, #tpu.memory_space<vmem>>, vector<1x128xf32>
    %16 = vector.broadcast %15 : vector<1x128xf32> to vector<4x128xf32>
    %17 = arith.addf %14, %16 : vector<4x128xf32>
    %c0_10 = arith.constant 0 : index
    %c0_11 = arith.constant 0 : index
    %18 = vector.load %arg5[%c0_10, %c0_11] : memref<4x128xf32, #tpu.memory_space<vmem>>, vector<4x128xf32>
    tpu.vector_store %arg5[%c0_10, %c0_11], %17 {strides = array<i32>} : memref<4x128xf32, #tpu.memory_space<vmem>>, vector<4x128xf32>,
    return
  }
  func.func @transform_0(%arg0: i32) -> (i32, i32) {
    %c0_i32 = arith.constant 0 : i32
    %c0_i32_0 = arith.constant 0 : i32
    return %arg0, %c0_i32 : i32, i32
  }
  func.func @transform_1(%arg0: i32) -> (i32, i32) {
    %c0_i32 = arith.constant 0 : i32
    %c0_i32_0 = arith.constant 0 : i32
    %c0_i32_1 = arith.constant 0 : i32
    return %c0_i32, %c0_i32_0 : i32, i32
  }
  func.func @transform_2(%arg0: i32) -> (i32, i32) {
    %c0_i32 = arith.constant 0 : i32
    %c0_i32_0 = arith.constant 0 : i32
    %c0_i32_1 = arith.constant 0 : i32
    return %c0_i32, %c0_i32_0 : i32, i32
  }
  func.func @transform_3(%arg0: i32) -> (i32, i32) {
    %c0_i32 = arith.constant 0 : i32
    %c0_i32_0 = arith.constant 0 : i32
    %c0_i32_1 = arith.constant 0 : i32
    return %c0_i32, %c0_i32_0 : i32, i32
  }
  func.func @transform_4(%arg0: i32) -> (i32, i32) {
    %c0_i32 = arith.constant 0 : i32
    %c0_i32_0 = arith.constant 0 : i32
    return %arg0, %c0_i32 : i32, i32
  }
}

</mosaic_0001>

<llo_original>
// kernel: tpu_custom_call.1
$region0: #{tpu_custom_call.1}
  #allocation0 [shape = 'u32[]', space=smem, size = 0x4, offset = 0x4, fixed_abs, tag = 'smem constant byte address 0x4 - core index']
  #allocation1 [shape = 'u32[72,128]{1,0:T(1,128)}', space=vmem, size = 0x9000, scoped, tag = 'internal scratch']
  %s0 = inlined_call_operand.hbm [shape: f32[4,128], index: 0, kind: input, shape index: {}]
  %s1 = inlined_call_operand.hbm [shape: f32[1,128], index: 1, kind: input, shape index: {}]
  %s2 = inlined_call_operand.vmem [shape: f32[1,128], index: 2, kind: input, shape index: {}]
  %s3 = inlined_call_operand.hbm [shape: f32[128,128], index: 3, kind: input, shape index: {}]
  %s4 = inlined_call_operand.hbm [shape: f32[4,128], index: 4, kind: output, shape index: {}]
  %s5 = sld [smem:[#allocation0]]
  $region38: #{tpu_custom_call.1} parent=0
    _
  %s7 = ssub.s32 1, %s5
  %s8 = scalar_select 0, %s7, %s5
  $region1: #{tpu_custom_call.1} parent=0
    #allocation2 [shape = 'u8[2048]{0}', space=vmem, size = 0x800, scoped, tag = 'input window, operand 0, single buffered']
    #allocation3 [shape = 's32[1]{0}', space=sflag, size = 0x4, scoped, tag = 'scoped memory for tpu_custom_call.1']
    #allocation4 [shape = 's32[1]{0}', space=sflag, size = 0x4, scoped, tag = 'scoped memory for tpu_custom_call.1']
    #allocation5 [shape = 'u8[512]{0}', space=vmem, size = 0x400, scoped, tag = 'input window, operand 1, single buffered']
    #allocation6 [shape = 's32[1]{0}', space=sflag, size = 0x4, scoped, tag = 'scoped memory for tpu_custom_call.1']
    #allocation7 [shape = 'u8[65536]{0}', space=vmem, size = 0x10000, scoped, tag = 'input window, operand 3, single buffered']
    #allocation8 [shape = 'u8[2048]{0}', space=vmem, size = 0x800, scoped, tag = 'output window, operand 0, single buffered']
    %9 = vsyncpa [#allocation3], 0
    %10 = vsyncpa [#allocation6], 0
    %11 = vsyncpa [#allocation4], 0
    // Predicated region
    $region2: #{tpu_custom_call.1} parent=1 // pred_check
      _
    $region3: #{tpu_custom_call.1} parent=1 // pred_check_branch
      %13 = sbr.rel (0) target = $region5
    $region4: #{tpu_custom_call.1} parent=1 // pred_region
      %15 = vsyncadd [#allocation3], 0
      %s17 = sshll.u32 %s0, 4
      %s18 = int_to_ptr.hbm [resolvable:$true] %s17
      %s19 = sshll.u32 [#allocation2], 4
      %s20 = int_to_ptr.vmem [resolvable:$true] %s19
      %22 = dma.hbm_to_vmem [thread:$0]  %s18, 64, %s20, [#allocation3]
    $region5: #{tpu_custom_call.1} parent=1 // pred_fallthru
      _
    // Predicated region
    $region6: #{tpu_custom_call.1} parent=1 // pred_check
      _
    $region7: #{tpu_custom_call.1} parent=1 // pred_check_branch
      %24 = sbr.rel (0) target = $region9
    $region8: #{tpu_custom_call.1} parent=1 // pred_region
      %26 = vsyncadd [#allocation6], 0
      %s28 = sshll.u32 %s1, 4
      %s29 = int_to_ptr.hbm [resolvable:$true] %s28
      %s30 = sshll.u32 [#allocation5], 4
      %s31 = int_to_ptr.vmem [resolvable:$true] %s30
      %33 = dma.hbm_to_vmem [thread:$0]  %s29, 16, %s31, [#allocation6]
    $region9: #{tpu_custom_call.1} parent=1 // pred_fallthru
      _
    // Predicated region
    $region10: #{tpu_custom_call.1} parent=1 // pred_check
      _
    $region11: #{tpu_custom_call.1} parent=1 // pred_check_branch
      %35 = sbr.rel (0) target = $region13
    $region12: #{tpu_custom_call.1} parent=1 // pred_region
      _
    $region13: #{tpu_custom_call.1} parent=1 // pred_fallthru
      _
    // Predicated region
    $region14: #{tpu_custom_call.1} parent=1 // pred_check
      _
    $region15: #{tpu_custom_call.1} parent=1 // pred_check_branch
      %37 = sbr.rel (0) target = $region17
    $region16: #{tpu_custom_call.1} parent=1 // pred_region
      %39 = vsyncadd [#allocation6], 0
      %s40 = sshll.u32 %s3, 4
      %s41 = int_to_ptr.hbm [resolvable:$true] %s40
      %s42 = sshll.u32 [#allocation7], 4
      %s43 = int_to_ptr.vmem [resolvable:$true] %s42
      %48 = dma.hbm_to_vmem [thread:$0]  %s41, 2048, %s43, [#allocation6], 128, 128, 8
    $region17: #{tpu_custom_call.1} parent=1 // pred_fallthru
      _
    // Predicated region
    $region18: #{tpu_custom_call.1} parent=1 // pred_check
      _
    $region19: #{tpu_custom_call.1} parent=1 // pred_check_branch
      %50 = sbr.rel (0) target = $region21
    $region20: #{tpu_custom_call.1} parent=1 // pred_region
      %52 = dma.done [#allocation3], 64
    $region21: #{tpu_custom_call.1} parent=1 // pred_fallthru
      _
    // Predicated region
    $region22: #{tpu_custom_call.1} parent=1 // pred_check
      _
    $region23: #{tpu_custom_call.1} parent=1 // pred_check_branch
      %54 = sbr.rel (0) target = $region25
    $region24: #{tpu_custom_call.1} parent=1 // pred_region
      %56 = dma.done [#allocation6], 16
    $region25: #{tpu_custom_call.1} parent=1 // pred_fallthru
      _
    // Predicated region
    $region26: #{tpu_custom_call.1} parent=1 // pred_check
      _
    $region27: #{tpu_custom_call.1} parent=1 // pred_check_branch
      %58 = sbr.rel (0) target = $region29
    $region28: #{tpu_custom_call.1} parent=1 // pred_region
      %60 = dma.done [#allocation6], 2048
    $region29: #{tpu_custom_call.1} parent=1 // pred_fallthru
      _
    %v61 = vld [vmem:[#allocation2] sm:$0xf]
    %v62 = vmax.f32 %v61, 0.0
    %v63 = vld [vmem:[#allocation7] sm:$0xff]
    %v64 = vld [vmem:[#allocation7 + $0x8] sm:$0xff]
    %v65 = vld [vmem:[#allocation7 + $0x10] sm:$0xff]
    %v66 = vld [vmem:[#allocation7 + $0x18] sm:$0xff]
    %v67 = vld [vmem:[#allocation7 + $0x20] sm:$0xff]
    %v68 = vld [vmem:[#allocation7 + $0x28] sm:$0xff]
    %v69 = vld [vmem:[#allocation7 + $0x30] sm:$0xff]
    %v70 = vld [vmem:[#allocation7 + $0x38] sm:$0xff]
    %v71 = vld [vmem:[#allocation7 + $0x40] sm:$0xff]
    %v72 = vld [vmem:[#allocation7 + $0x48] sm:$0xff]
    %v73 = vld [vmem:[#allocation7 + $0x50] sm:$0xff]
    %v74 = vld [vmem:[#allocation7 + $0x58] sm:$0xff]
    %v75 = vld [vmem:[#allocation7 + $0x60] sm:$0xff]
    %v76 = vld [vmem:[#allocation7 + $0x68] sm:$0xff]
    %v77 = vld [vmem:[#allocation7 + $0x70] sm:$0xff]
    %v78 = vld [vmem:[#allocation7 + $0x78] sm:$0xff]
    %79 = vmatpush.msra.mxu0 %v78
    %80 = vmatpush.msra.mxu0 %v77
    %81 = vmatpush.msra.mxu0 %v76
    %82 = vmatpush.msra.mxu0 %v75
    %83 = vmatpush.msra.mxu0 %v74
    %84 = vmatpush.msra.mxu0 %v73
    %85 = vmatpush.msra.mxu0 %v72
    %86 = vmatpush.msra.mxu0 %v71
    %87 = vmatpush.msra.mxu0 %v70
    %88 = vmatpush.msra.mxu0 %v69
    %89 = vmatpush.msra.mxu0 %v68
    %90 = vmatpush.msra.mxu0 %v67
    %91 = vmatpush.msra.mxu0 %v66
    %92 = vmatpush.msra.mxu0 %v65
    %93 = vmatpush.msra.mxu0 %v64
    %94 = vmatpush.msra.mxu0 %v63
    %95 = vmatmul.f32.gmra.mxu0 %v62
    %v96 = vpop.f32.mrf.mxu0
    %v97 = vadd.f32 0.0, %v96
    %98 = vdwg.mxu0
    %v99 = vsub.f32 %v62, %v97
    %v100 = vmul.f32 %v99, %v99
    %101 = vmatpush.msra.mxu0 %v78
    %102 = vmatpush.msra.mxu0 %v77
    %103 = vmatpush.msra.mxu0 %v76
    %104 = vmatpush.msra.mxu0 %v75
    %105 = vmatpush.msra.mxu0 %v74
    %106 = vmatpush.msra.mxu0 %v73
    %107 = vmatpush.msra.mxu0 %v72
    %108 = vmatpush.msra.mxu0 %v71
    %109 = vmatpush.msra.mxu0 %v70
    %110 = vmatpush.msra.mxu0 %v69
    %111 = vmatpush.msra.mxu0 %v68
    %112 = vmatpush.msra.mxu0 %v67
    %113 = vmatpush.msra.mxu0 %v66
    %114 = vmatpush.msra.mxu0 %v65
    %115 = vmatpush.msra.mxu0 %v64
    %116 = vmatpush.msra.mxu0 %v63
    %117 = vmatmul.f32.gmra.mxu0 %v100
    %v118 = vpop.f32.mrf.mxu0
    %v119 = vadd.f32 1e-05, %v118
    %120 = vdwg.mxu0
    %v121 = vrsqrt.pop %v119
    %v122 = vmul.f32 %v121, %v119
    %v123 = vmul.f32 %v122, %v121
    %v124 = vmul.f32 0.5, %v123
    %v125 = vsub.f32 1.5, %v124
    %v126 = vmul.f32 %v121, %v125
    %vm127 = vweird.f32 %v119
    %vm128 = vweird.f32 %v121
    %vm129 = vmor %vm127, %vm128
    %v130 = vsel %vm129, %v121, %v126
    %v131 = vmul.f32 %v99, %v130
    %v132 = vld [vmem:[#allocation5] sm:$0x1]
    %v134 = vperm.slane %v132, 0
    %v136 = vmul.f32 %v131, %v134
    %v137 = vld [vmem:[%s2] sm:$0x1]
    %v139 = vperm.slane %v137, 0
    %v141 = vadd.f32 %v136, %v139
    %142 = vst [vmem:[#allocation8] sm:$0xf] %v141
    // Predicated region
    $region30: #{tpu_custom_call.1} parent=1 // pred_check
      _
    $region31: #{tpu_custom_call.1} parent=1 // pred_check_branch
      %144 = sbr.rel (0) target = $region33
    $region32: #{tpu_custom_call.1} parent=1 // pred_region
      %146 = vsyncadd [#allocation4], 0
      %s148 = sshll.u32 [#allocation8], 4
      %s149 = int_to_ptr.vmem [resolvable:$true] %s148
      %s150 = sshll.u32 %s4, 4
      %s151 = int_to_ptr.hbm [resolvable:$true] %s150
      %153 = dma.vmem_to_hbm [thread:$0]  %s149, 64, %s151, [#allocation4]
    $region33: #{tpu_custom_call.1} parent=1 // pred_fallthru
      _
    // Predicated region
    $region34: #{tpu_custom_call.1} parent=1 // pred_check
      _
    $region35: #{tpu_custom_call.1} parent=1 // pred_check_branch
      %155 = sbr.rel (0) target = $region37
    $region36: #{tpu_custom_call.1} parent=1 // pred_region
      %157 = dma.done [#allocation4], 64
    $region37: #{tpu_custom_call.1} parent=1 // pred_fallthru
      _
    %158 = vsyncpa [#allocation3], 1
    %159 = vsyncpa [#allocation6], 1
    %160 = vsyncpa [#allocation4], 1

</llo_original>
